<compile_context>
chip_gen: v6e
topology: v6e:2x2x1
jax: 0.10.0
libtpu: 0.0.40
codegen_flags: <defaults>
</compile_context>

<pallas_src>
import functools

import jax
import jax.numpy as jnp
from jax.experimental import pallas as pl
from jax.experimental.pallas import tpu as pltpu


def _round_up(x, m):
    return ((x + m - 1) // m) * m


def _ce_kernel(tgt_ref, seg_ref, *refs, n_streams, tile_r, spr, c_pad,
               n_valid, blocks_per_split, needs_mask):
    logit_refs = refs[:n_streams]
    out_refs = refs[n_streams:2 * n_streams]
    acc_refs = refs[2 * n_streams:]

    c = pl.program_id(0)   # split of the packed-row blocks (core-parallel on v7x)
    i = pl.program_id(1)   # sequential reduction over packed-row blocks

    @pl.when(i == 0)
    def _():
        for s in range(n_streams):
            acc_refs[s][...] = jnp.zeros_like(acc_refs[s])

    # ---- stream-invariant work, hoisted out of the coarse/fine loop ----
    tgt = tgt_ref[...]                                       # (TR,128) int32, class id repeated
    seg_mat = seg_ref[...]                                   # (128,128) f32 segment-sum matrix
    lane = jax.lax.broadcasted_iota(jnp.int32, (1, 128), 1)  # lane index
    class_map = lane % c_pad                                 # class id carried by each lane
    onehot = class_map == tgt                                # (TR,128) bool

    if needs_mask:
        row = jax.lax.broadcasted_iota(jnp.int32, (tile_r, 1), 0)
        row0 = (c * blocks_per_split + i) * tile_r           # intended (unclamped) row offset
        sample = (row0 + row) * spr + lane // c_pad          # global sample index per lane
        valid = sample < n_valid                             # (TR,128) bool

    inv_c = jnp.float32(1.0 / c_pad)

    for s in range(n_streams):
        x = logit_refs[s][...].astype(jnp.float32)           # (TR,128) lane-dense logits
        # stabilizing max per 128-lane row (spr samples share it)
        rmax = jnp.max(x, axis=-1, keepdims=True)            # (TR,1)
        e = jnp.exp(x - rmax)
        # per-sample sum of exp, broadcast dense across each c_pad-lane segment (MXU)
        seg = jnp.dot(e, seg_mat, preferred_element_type=jnp.float32)
        # per-lane value: lse/c_pad (summed over the segment -> lse per sample)
        # minus the one-hot-selected target logit.
        v = (rmax + jnp.log(seg)) * inv_c - jnp.where(onehot, x, 0.0)
        if needs_mask:
            v = jnp.where(valid, v, 0.0)
        # tiny resident accumulator: one vreg per stream
        acc_refs[s][...] += jnp.sum(v, axis=0, keepdims=True)

    @pl.when(i == pl.num_programs(1) - 1)
    def _():
        for s in range(n_streams):
            out_refs[s][...] = jnp.sum(acc_refs[s][...]).reshape(1, 1)


def _cross_entropy_means(logits_list, targets, *, max_tile_rows=2048, num_splits=1):
    """Mean cross-entropy for each (N, C) logits array in `logits_list`.

    All arrays share the same integer `targets` of shape (N,). Returns a list
    of 0-d f32 scalars, computed in a single fused pallas_call.
    `num_splits` should be 1 on v5e/v6e and 2 on v7x (dual TensorCore).
    """
    n, c_classes = logits_list[0].shape
    for x in logits_list:
        assert x.shape == (n, c_classes)
    assert targets.shape[0] == n
    n_streams = len(logits_list)

    if c_classes > 128:
        # TODO(synk): multi-row segments for >128 classes.
        raise NotImplementedError("NeRF semantics CE kernel supports <=128 classes")

    # segment width: smallest power of two >= C (divides 128)
    c_pad = 1
    while c_pad < c_classes:
        c_pad *= 2
    spr = 128 // c_pad                       # samples packed per 128-lane row

    # pad sample count so the packed row count is a multiple of the sublane tile
    n_pad = _round_up(n, 8 * spr)
    neg = jnp.float32(-1e30)

    packed = []
    for x in logits_list:
        if c_pad != c_classes:
            x = jnp.pad(x, ((0, 0), (0, c_pad - c_classes)), constant_values=neg)
        if n_pad != n:
            x = jnp.pad(x, ((0, n_pad - n), (0, 0)))
        packed.append(x.reshape(n_pad // spr, 128))          # free row-major reshape

    t = targets.astype(jnp.int32)
    if n_pad != n:
        t = jnp.pad(t, (0, n_pad - n))
    tgt_rep = jnp.repeat(t, c_pad).reshape(n_pad // spr, 128)

    lane = jnp.arange(128, dtype=jnp.int32)
    seg_mat = (lane[:, None] // c_pad == lane[None, :] // c_pad).astype(jnp.float32)

    r_rows = n_pad // spr

    # VMEM-aware row tiling with real lane-dense byte counts (double-buffered)
    bytes_per_row = 128 * 4 + sum(128 * x.dtype.itemsize for x in logits_list)
    vmem_budget = 12 * 1024 * 1024
    rows_cap = max(16, ((vmem_budget // (2 * bytes_per_row)) // 16) * 16)
    tile_r = min(r_rows, rows_cap, max_tile_rows)

    total_blocks = pl.cdiv(r_rows, tile_r)
    blocks_per_split = pl.cdiv(total_blocks, num_splits)
    covered = num_splits * blocks_per_split * tile_r * spr
    needs_mask = covered != n
    # tie the mask decision to the coverage math so rounding changes can't
    # silently double-count the clamped tail block
    assert covered >= n_pad >= n
    assert (covered == n) == (not needs_mask)

    def row_block(cc, ii):
        # clamp so dummy / tail iterations never DMA fully out of bounds;
        # their lanes are masked to zero inside the kernel.
        return jnp.minimum(cc * blocks_per_split + ii, total_blocks - 1)

    in_specs = [
        pl.BlockSpec((tile_r, 128), lambda cc, ii: (row_block(cc, ii), 0)),  # targets
        pl.BlockSpec((128, 128), lambda cc, ii: (0, 0)),                     # segment matrix
    ]
    in_specs += [pl.BlockSpec((tile_r, 128), lambda cc, ii: (row_block(cc, ii), 0))
                 for _ in range(n_streams)]
    out_specs = [pl.BlockSpec((1, 1), lambda cc, ii: (cc, 0))
                 for _ in range(n_streams)]

    kernel = functools.partial(
        _ce_kernel, n_streams=n_streams, tile_r=tile_r, spr=spr, c_pad=c_pad,
        n_valid=n, blocks_per_split=blocks_per_split, needs_mask=needs_mask)

    if num_splits > 1:
        dim_sem = (pltpu.CORE_PARALLEL, pltpu.ARBITRARY)   # real 2-TC split on v7x
    else:
        dim_sem = ("arbitrary", "arbitrary")

    partials = pl.pallas_call(
        kernel,
        out_shape=tuple(jax.ShapeDtypeStruct((num_splits, 1), jnp.float32)
                        for _ in range(n_streams)),
        grid_spec=pltpu.PrefetchScalarGridSpec(
            num_scalar_prefetch=0,
            grid=(num_splits, blocks_per_split),
            in_specs=in_specs,
            out_specs=out_specs,
            scratch_shapes=[pltpu.VMEM((1, 128), jnp.float32)
                            for _ in range(n_streams)],
        ),
        compiler_params=pltpu.CompilerParams(
            dimension_semantics=dim_sem,
            vmem_limit_bytes=32 * 1024 * 1024),
    )(tgt_rep, seg_mat, *packed)

    if not isinstance(partials, (list, tuple)):
        partials = (partials,)

    inv_n = jnp.float32(1.0 / n)
    # per-split partial sums -> mean; division kept outside the kernel.
    return [jnp.sum(p) * inv_n for p in partials]


def nerf_semantics_loss(inputs, targets, key):
    """JAX/Pallas equivalent of NeRFSemanticsLoss.forward.

    Matches the torch module's return convention: a computed loss is a 0-d
    scalar (like nn.CrossEntropyLoss), a missing key yields zeros([1]).
    """
    k_coarse, k_fine = f"{key}_coarse", f"{key}_fine"
    has_c, has_f = k_coarse in inputs, k_fine in inputs
    loss_coarse = jnp.zeros([1], dtype=jnp.float32)
    loss_fine = jnp.zeros([1], dtype=jnp.float32)
    if has_c and has_f:
        loss_coarse, loss_fine = _cross_entropy_means(
            [inputs[k_coarse], inputs[k_fine]], targets)
    elif has_c:
        (loss_coarse,) = _cross_entropy_means([inputs[k_coarse]], targets)
    elif has_f:
        (loss_fine,) = _cross_entropy_means([inputs[k_fine]], targets)
    return loss_coarse, loss_fine


def _reference_ce(logits, targets):
    logits = logits.astype(jnp.float32)
    lse = jax.nn.logsumexp(logits, axis=-1)
    tgt = jnp.take_along_axis(logits, targets[:, None].astype(jnp.int32),
                              axis=-1)[:, 0]
    return jnp.mean(lse - tgt)


if __name__ == "__main__":
    key = jax.random.PRNGKey(0)
    k1, k2, k3, k4, k5, k6, k7 = jax.random.split(key, 7)

    N, C = 128, 16   # rays x semantic classes (small synthetic shapes)
    sem_coarse = jax.random.normal(k1, (N, C), dtype=jnp.float32)
    sem_fine = jax.random.normal(k2, (N, C), dtype=jnp.float32)
    targets = jax.random.randint(k3, (N,), 0, C, dtype=jnp.int32)

    inputs = {"sem_coarse": sem_coarse, "sem_fine": sem_fine}

    loss_c, loss_f = nerf_semantics_loss(inputs, targets, "sem")
    loss_c = jax.block_until_ready(loss_c)
    loss_f = jax.block_until_ready(loss_f)

    ref_c = _reference_ce(sem_coarse, targets)
    ref_f = _reference_ce(sem_fine, targets)
    assert jnp.allclose(loss_c, ref_c, atol=1e-4, rtol=1e-5), (loss_c, ref_c)
    assert jnp.allclose(loss_f, ref_f, atol=1e-4, rtol=1e-5), (loss_f, ref_f)

    # ragged N (not a multiple of the packed row group) exercises the mask path
    N2 = 100
    sem2 = jax.random.normal(k4, (N2, C), dtype=jnp.float32)
    tgt2 = jax.random.randint(k5, (N2,), 0, C, dtype=jnp.int32)
    (loss2,) = _cross_entropy_means([sem2], tgt2)
    loss2 = jax.block_until_ready(loss2)
    assert jnp.allclose(loss2, _reference_ce(sem2, tgt2), atol=1e-4, rtol=1e-5)

    # bf16 logits are streamed as bf16 (f32 accumulation happens in-kernel)
    sem_bf16 = sem_fine.astype(jnp.bfloat16)
    (loss_b,) = _cross_entropy_means([sem_bf16], targets)
    loss_b = jax.block_until_ready(loss_b)
    ref_b = _reference_ce(sem_bf16.astype(jnp.float32), targets)
    assert jnp.allclose(loss_b, ref_b, atol=2e-2, rtol=2e-2), (loss_b, ref_b)

    # class count that is not a power of two exercises the class-padding path
    C3 = 10
    sem3 = jax.random.normal(k6, (N, C3), dtype=jnp.float32)
    tgt3 = jax.random.randint(k7, (N,), 0, C3, dtype=jnp.int32)
    (loss3,) = _cross_entropy_means([sem3], tgt3)
    loss3 = jax.block_until_ready(loss3)
    assert jnp.allclose(loss3, _reference_ce(sem3, tgt3), atol=1e-4, rtol=1e-5)

    # missing-key path returns zeros([1]), matching the torch module
    lc0, lf0 = nerf_semantics_loss({"sem_fine": sem_fine}, targets, "sem")
    assert lc0.shape == (1,) and float(lc0[0]) == 0.0

    print("KERNEL_OK")
</pallas_src>

<mosaic_0001>
module attributes {stable_mosaic.version = 11 : i64} {
  func.func @_ce_kernel(%arg0: i32, %arg1: i32, %arg2: memref<16x128xi32, #tpu.memory_space<vmem>>, %arg3: memref<128x128xf32, #tpu.memory_space<vmem>>, %arg4: memref<16x128xf32, #tpu.memory_space<vmem>>, %arg5: memref<16x128xf32, #tpu.memory_space<vmem>>, %arg6: memref<1x1xf32, #tpu.memory_space<vmem>>, %arg7: memref<1x1xf32, #tpu.memory_space<vmem>>, %arg8: memref<1x128xf32, #tpu.memory_space<vmem>>, %arg9: memref<1x128xf32, #tpu.memory_space<vmem>>) attributes {dimension_semantics = [#tpu.dimension_semantics<arbitrary>, #tpu.dimension_semantics<arbitrary>], iteration_bounds = array<i64: 1, 1>, scalar_prefetch = 0 : i64, scratch_operands = 2 : i64, tpu.core_type = #tpu.core_type<tc>, window_params = [{transform_indices = @transform_0, window_bounds = array<i64: 16, 128>}, {pipeline_mode = #tpu.pipeline_mode<synchronous>, transform_indices = @transform_1, window_bounds = array<i64: 128, 128>}, {transform_indices = @transform_2, window_bounds = array<i64: 16, 128>}, {transform_indices = @transform_3, window_bounds = array<i64: 16, 128>}, {transform_indices = @transform_4, window_bounds = array<i64: 1, 1>}, {transform_indices = @transform_5, window_bounds = array<i64: 1, 1>}]} {
    %c0_i32 = arith.constant 0 : i32
    %0 = arith.cmpi eq, %arg1, %c0_i32 : i32
    %1 = arith.extui %0 : i1 to i32
    %c0_i32_0 = arith.constant 0 : i32
    %2 = arith.cmpi ne, %1, %c0_i32_0 : i32
    scf.if %2 {
      %cst_31 = arith.constant 0.000000e+00 : f32
      %67 = vector.broadcast %cst_31 : f32 to vector<1x128xf32>
      %c0_32 = arith.constant 0 : index
      %c0_33 = arith.constant 0 : index
      %68 = vector.load %arg8[%c0_32, %c0_33] : memref<1x128xf32, #tpu.memory_space<vmem>>, vector<1x128xf32>
      tpu.vector_store %arg8[%c0_32, %c0_33], %67 {strides = array<i32>} : memref<1x128xf32, #tpu.memory_space<vmem>>, vector<1x128xf32>,
      %cst_34 = arith.constant 0.000000e+00 : f32
      %69 = vector.broadcast %cst_34 : f32 to vector<1x128xf32>
      %c0_35 = arith.constant 0 : index
      %c0_36 = arith.constant 0 : index
      %70 = vector.load %arg9[%c0_35, %c0_36] : memref<1x128xf32, #tpu.memory_space<vmem>>, vector<1x128xf32>
      tpu.vector_store %arg9[%c0_35, %c0_36], %69 {strides = array<i32>} : memref<1x128xf32, #tpu.memory_space<vmem>>, vector<1x128xf32>,
    } else {
    }
    %c0 = arith.constant 0 : index
    %c0_1 = arith.constant 0 : index
    %3 = vector.load %arg2[%c0, %c0_1] : memref<16x128xi32, #tpu.memory_space<vmem>>, vector<16x128xi32>
    %c0_2 = arith.constant 0 : index
    %c0_3 = arith.constant 0 : index
    %4 = vector.load %arg3[%c0_2, %c0_3] : memref<128x128xf32, #tpu.memory_space<vmem>>, vector<128x128xf32>
    %5 = tpu.iota {dimensions = array<i32: 1>} : vector<1x128xi32>
    %c16_i32 = arith.constant 16 : i32
    %c0_i32_4 = arith.constant 0 : i32
    %6 = arith.cmpi eq, %c16_i32, %c0_i32_4 : i32
    %c1_i32 = arith.constant 1 : i32
    %7 = arith.select %6, %c1_i32, %c16_i32 : i32
    %8 = vector.broadcast %7 : i32 to vector<1x128xi32>
    %9 = arith.remsi %5, %8 : vector<1x128xi32>
    %c0_i32_5 = arith.constant 0 : i32
    %10 = vector.broadcast %c0_i32_5 : i32 to vector<1x128xi32>
    %11 = arith.cmpi ne, %9, %10 : vector<1x128xi32>
    %c0_i32_6 = arith.constant 0 : i32
    %12 = vector.broadcast %c0_i32_6 : i32 to vector<1x128xi32>
    %13 = arith.cmpi slt, %9, %12 : vector<1x128xi32>
    %c0_i32_7 = arith.constant 0 : i32
    %14 = arith.cmpi slt, %7, %c0_i32_7 : i32
    %15 = vector.broadcast %14 : i1 to vector<1x128xi1>
    %16 = vector.broadcast %15 : vector<1x128xi1> to vector<1x128xi1>
    %17 = arith.xori %13, %16 : vector<1x128xi1>
    %18 = arith.andi %17, %11 : vector<1x128xi1>
    %19 = vector.broadcast %7 : i32 to vector<1x128xi32>
    %20 = arith.addi %9, %19 : vector<1x128xi32>
    %21 = arith.select %18, %20, %9 : vector<1x128xi1>, vector<1x128xi32>
    %22 = vector.broadcast %21 : vector<1x128xi32> to vector<16x128xi32>
    %23 = arith.cmpi eq, %22, %3 : vector<16x128xi32>
    %c0_8 = arith.constant 0 : index
    %c0_9 = arith.constant 0 : index
    %24 = vector.load %arg4[%c0_8, %c0_9] : memref<16x128xf32, #tpu.memory_space<vmem>>, vector<16x128xf32>
    %cst = arith.constant dense<0xFF800000> : vector<16xf32>
    %25 = vector.multi_reduction <maximumf>, %24, %cst [1] : vector<16x128xf32> to vector<16xf32>
    %26 = vector.shape_cast %25 : vector<16xf32> to vector<16x1xf32>
    %27 = vector.broadcast %26 : vector<16x1xf32> to vector<16x128xf32>
    %28 = arith.subf %24, %27 : vector<16x128xf32>
    %29 = math.exp %28 : vector<16x128xf32>
    %cst_10 = arith.constant dense<0.000000e+00> : vector<16x128xf32>
    %30 = tpu.matmul %29, %4, %cst_10 {dimension_numbers = #tpu.dot_dimension_numbers<[1], [0], [0], [1], [0, 0, 1, 1], [], []>} : vector<16x128xf32>, vector<128x128xf32>, vector<16x128xf32> -> vector<16x128xf32>
    %31 = math.log %30 : vector<16x128xf32>
    %32 = vector.broadcast %26 : vector<16x1xf32> to vector<16x128xf32>
    %33 = arith.addf %32, %31 : vector<16x128xf32>
    %cst_11 = arith.constant 6.250000e-02 : f32
    %34 = vector.broadcast %cst_11 : f32 to vector<16x128xf32>
    %35 = arith.mulf %33, %34 : vector<16x128xf32>
    %cst_12 = arith.constant 0.000000e+00 : f32
    %36 = vector.broadcast %cst_12 : f32 to vector<16x128xf32>
    %37 = arith.select %23, %24, %36 : vector<16x128xi1>, vector<16x128xf32>
    %38 = arith.subf %35, %37 : vector<16x128xf32>
    %c0_13 = arith.constant 0 : index
    %c0_14 = arith.constant 0 : index
    %39 = vector.load %arg8[%c0_13, %c0_14] : memref<1x128xf32, #tpu.memory_space<vmem>>, vector<1x128xf32>
    %cst_15 = arith.constant dense<0.000000e+00> : vector<128xf32>
    %40 = vector.multi_reduction <add>, %38, %cst_15 [0] : vector<16x128xf32> to vector<128xf32>
    %41 = vector.shape_cast %40 : vector<128xf32> to vector<1x128xf32>
    %42 = arith.addf %39, %41 : vector<1x128xf32>
    %c0_16 = arith.constant 0 : index
    %c0_17 = arith.constant 0 : index
    %43 = vector.load %arg8[%c0_16, %c0_17] : memref<1x128xf32, #tpu.memory_space<vmem>>, vector<1x128xf32>
    tpu.vector_store %arg8[%c0_16, %c0_17], %42 {strides = array<i32>} : memref<1x128xf32, #tpu.memory_space<vmem>>, vector<1x128xf32>,
    %c0_18 = arith.constant 0 : index
    %c0_19 = arith.constant 0 : index
    %44 = vector.load %arg5[%c0_18, %c0_19] : memref<16x128xf32, #tpu.memory_space<vmem>>, vector<16x128xf32>
    %cst_20 = arith.constant dense<0xFF800000> : vector<16xf32>
    %45 = vector.multi_reduction <maximumf>, %44, %cst_20 [1] : vector<16x128xf32> to vector<16xf32>
    %46 = vector.shape_cast %45 : vector<16xf32> to vector<16x1xf32>
    %47 = vector.broadcast %46 : vector<16x1xf32> to vector<16x128xf32>
    %48 = arith.subf %44, %47 : vector<16x128xf32>
    %49 = math.exp %48 : vector<16x128xf32>
    %cst_21 = arith.constant dense<0.000000e+00> : vector<16x128xf32>
    %50 = tpu.matmul %49, %4, %cst_21 {dimension_numbers = #tpu.dot_dimension_numbers<[1], [0], [0], [1], [0, 0, 1, 1], [], []>} : vector<16x128xf32>, vector<128x128xf32>, vector<16x128xf32> -> vector<16x128xf32>
    %51 = math.log %50 : vector<16x128xf32>
    %52 = vector.broadcast %46 : vector<16x1xf32> to vector<16x128xf32>
    %53 = arith.addf %52, %51 : vector<16x128xf32>
    %cst_22 = arith.constant 6.250000e-02 : f32
    %54 = vector.broadcast %cst_22 : f32 to vector<16x128xf32>
    %55 = arith.mulf %53, %54 : vector<16x128xf32>
    %cst_23 = arith.constant 0.000000e+00 : f32
    %56 = vector.broadcast %cst_23 : f32 to vector<16x128xf32>
    %57 = arith.select %23, %44, %56 : vector<16x128xi1>, vector<16x128xf32>
    %58 = arith.subf %55, %57 : vector<16x128xf32>
    %c0_24 = arith.constant 0 : index
    %c0_25 = arith.constant 0 : index
    %59 = vector.load %arg9[%c0_24, %c0_25] : memref<1x128xf32, #tpu.memory_space<vmem>>, vector<1x128xf32>
    %cst_26 = arith.constant dense<0.000000e+00> : vector<128xf32>
    %60 = vector.multi_reduction <add>, %58, %cst_26 [0] : vector<16x128xf32> to vector<128xf32>
    %61 = vector.shape_cast %60 : vector<128xf32> to vector<1x128xf32>
    %62 = arith.addf %59, %61 : vector<1x128xf32>
    %c0_27 = arith.constant 0 : index
    %c0_28 = arith.constant 0 : index
    %63 = vector.load %arg9[%c0_27, %c0_28] : memref<1x128xf32, #tpu.memory_space<vmem>>, vector<1x128xf32>
    tpu.vector_store %arg9[%c0_27, %c0_28], %62 {strides = array<i32>} : memref<1x128xf32, #tpu.memory_space<vmem>>, vector<1x128xf32>,
    %c0_i32_29 = arith.constant 0 : i32
    %64 = arith.cmpi eq, %arg1, %c0_i32_29 : i32
    %65 = arith.extui %64 : i1 to i32
    %c0_i32_30 = arith.constant 0 : i32
    %66 = arith.cmpi ne, %65, %c0_i32_30 : i32
    scf.if %66 {
      %c0_31 = arith.constant 0 : index
      %c0_32 = arith.constant 0 : index
      %67 = vector.load %arg8[%c0_31, %c0_32] : memref<1x128xf32, #tpu.memory_space<vmem>>, vector<1x128xf32>
      %68 = vector.shape_cast %67 : vector<1x128xf32> to vector<1x1x128xf32>
      %cst_33 = arith.constant dense<0.000000e+00> : vector<1xf32>
      %69 = vector.multi_reduction <add>, %68, %cst_33 [1, 2] : vector<1x1x128xf32> to vector<1xf32>
      %70 = vector.shape_cast %69 : vector<1xf32> to vector<1x1x1xf32>
      %71 = vector.extract %70[0, 0, 0] : f32 from vector<1x1x1xf32>
      %72 = vector.broadcast %71 : f32 to vector<1x1xf32>
      %c0_34 = arith.constant 0 : index
      %c0_35 = arith.constant 0 : index
      %73 = vector.load %arg6[%c0_34, %c0_35] : memref<1x1xf32, #tpu.memory_space<vmem>>, vector<1x1xf32>
      tpu.vector_store %arg6[%c0_34, %c0_35], %72 {strides = array<i32>} : memref<1x1xf32, #tpu.memory_space<vmem>>, vector<1x1xf32>,
      %c0_36 = arith.constant 0 : index
      %c0_37 = arith.constant 0 : index
      %74 = vector.load %arg9[%c0_36, %c0_37] : memref<1x128xf32, #tpu.memory_space<vmem>>, vector<1x128xf32>
      %75 = vector.shape_cast %74 : vector<1x128xf32> to vector<1x1x128xf32>
      %cst_38 = arith.constant dense<0.000000e+00> : vector<1xf32>
      %76 = vector.multi_reduction <add>, %75, %cst_38 [1, 2] : vector<1x1x128xf32> to vector<1xf32>
      %77 = vector.shape_cast %76 : vector<1xf32> to vector<1x1x1xf32>
      %78 = vector.extract %77[0, 0, 0] : f32 from vector<1x1x1xf32>
      %79 = vector.broadcast %78 : f32 to vector<1x1xf32>
      %c0_39 = arith.constant 0 : index
      %c0_40 = arith.constant 0 : index
      %80 = vector.load %arg7[%c0_39, %c0_40] : memref<1x1xf32, #tpu.memory_space<vmem>>, vector<1x1xf32>
      tpu.vector_store %arg7[%c0_39, %c0_40], %79 {strides = array<i32>} : memref<1x1xf32, #tpu.memory_space<vmem>>, vector<1x1xf32>,
    } else {
    }
    return
  }
  func.func @transform_0(%arg0: i32, %arg1: i32) -> (i32, i32) {
    %c1_i32 = arith.constant 1 : i32
    %0 = arith.muli %arg0, %c1_i32 : i32
    %1 = arith.addi %0, %arg1 : i32
    %c0_i32 = arith.constant 0 : i32
    %2 = arith.minsi %1, %c0_i32 : i32
    %c0_i32_0 = arith.constant 0 : i32
    %c0_i32_1 = arith.constant 0 : i32
    return %2, %c0_i32_0 : i32, i32
  }
  func.func @transform_1(%arg0: i32, %arg1: i32) -> (i32, i32) {
    %c0_i32 = arith.constant 0 : i32
    %c0_i32_0 = arith.constant 0 : i32
    %c0_i32_1 = arith.constant 0 : i32
    return %c0_i32, %c0_i32_0 : i32, i32
  }
  func.func @transform_2(%arg0: i32, %arg1: i32) -> (i32, i32) {
    %c1_i32 = arith.constant 1 : i32
    %0 = arith.muli %arg0, %c1_i32 : i32
    %1 = arith.addi %0, %arg1 : i32
    %c0_i32 = arith.constant 0 : i32
    %2 = arith.minsi %1, %c0_i32 : i32
    %c0_i32_0 = arith.constant 0 : i32
    %c0_i32_1 = arith.constant 0 : i32
    return %2, %c0_i32_0 : i32, i32
  }
  func.func @transform_3(%arg0: i32, %arg1: i32) -> (i32, i32) {
    %c1_i32 = arith.constant 1 : i32
    %0 = arith.muli %arg0, %c1_i32 : i32
    %1 = arith.addi %0, %arg1 : i32
    %c0_i32 = arith.constant 0 : i32
    %2 = arith.minsi %1, %c0_i32 : i32
    %c0_i32_0 = arith.constant 0 : i32
    %c0_i32_1 = arith.constant 0 : i32
    return %2, %c0_i32_0 : i32, i32
  }
  func.func @transform_4(%arg0: i32, %arg1: i32) -> (i32, i32) {
    %c0_i32 = arith.constant 0 : i32
    %c0_i32_0 = arith.constant 0 : i32
    return %arg0, %c0_i32 : i32, i32
  }
  func.func @transform_5(%arg0: i32, %arg1: i32) -> (i32, i32) {
    %c0_i32 = arith.constant 0 : i32
    %c0_i32_0 = arith.constant 0 : i32
    return %arg0, %c0_i32 : i32, i32
  }
}

</mosaic_0001>

<llo_original>
// kernel: tpu_custom_call.1
$region0: #{tpu_custom_call.1}
  #allocation0 [shape = 'u32[]', space=smem, size = 0x4, offset = 0x4, fixed_abs, tag = 'smem constant byte address 0x4 - core index']
  #allocation1 [shape = 'u32[144,128]{1,0:T(1,128)}', space=vmem, size = 0x12000, scoped, tag = 'internal scratch']
  #allocation2 [shape = 'f32[1,128]{1,0:T(1,128)}', space=vmem, size = 0x200, scoped, tag = 'scratch operand']
  #allocation3 [shape = 'f32[1,128]{1,0:T(1,128)}', space=vmem, size = 0x200, scoped, tag = 'scratch operand']
  %s0 = inlined_call_operand.hbm [shape: s32[16,128], index: 0, kind: input, shape index: {}]
  %s1 = inlined_call_operand.hbm [shape: f32[128,128], index: 1, kind: input, shape index: {}]
  %s2 = inlined_call_operand.hbm [shape: f32[16,128], index: 2, kind: input, shape index: {}]
  %s3 = inlined_call_operand.hbm [shape: f32[16,128], index: 3, kind: input, shape index: {}]
  %s4 = inlined_call_operand.hbm [shape: f32[1,1], index: 4, kind: output, shape index: {0}]
  %s5 = inlined_call_operand.hbm [shape: f32[1,1], index: 5, kind: output, shape index: {1}]
  %6 = xla_tuple %s4, %s5
  %s7 = sld [smem:[#allocation0]]
  $region58: #{tpu_custom_call.1} parent=0
    _
  %s9 = ssub.s32 1, %s7
  %s10 = scalar_select 0, %s9, %s7
  $region1: #{tpu_custom_call.1} parent=0
    #allocation4 [shape = 'u8[8192]{0}', space=vmem, size = 0x2000, scoped, tag = 'input window, operand 0, single buffered']
    #allocation5 [shape = 's32[1]{0}', space=sflag, size = 0x4, scoped, tag = 'scoped memory for tpu_custom_call.1']
    #allocation6 [shape = 's32[1]{0}', space=sflag, size = 0x4, scoped, tag = 'scoped memory for tpu_custom_call.1']
    #allocation7 [shape = 'u8[65536]{0}', space=vmem, size = 0x10000, scoped, tag = 'input window, operand 1, single buffered']
    #allocation8 [shape = 's32[1]{0}', space=sflag, size = 0x4, scoped, tag = 'scoped memory for tpu_custom_call.1']
    #allocation9 [shape = 'u8[8192]{0}', space=vmem, size = 0x2000, scoped, tag = 'input window, operand 2, single buffered']
    #allocation10 [shape = 'u8[8192]{0}', space=vmem, size = 0x2000, scoped, tag = 'input window, operand 3, single buffered']
    #allocation11 [shape = 's32[1]{0}', space=sflag, size = 0x4, scoped, tag = 'scoped memory for tpu_custom_call.1']
    #allocation12 [shape = 'u8[512]{0}', space=vmem, size = 0x400, scoped, tag = 'output window, operand 0, single buffered']
    #allocation13 [shape = 'u8[512]{0}', space=vmem, size = 0x400, scoped, tag = 'output window, operand 1, single buffered']
    #allocation14 [shape = 's32[1]{0}', space=sflag, size = 0x4, scoped, tag = 'scoped memory for tpu_custom_call.1']
    %11 = vsyncpa [#allocation5], 0
    %12 = vsyncpa [#allocation8], 0
    %13 = vsyncpa [#allocation11], 0
    %14 = vsyncpa [#allocation6], 0
    %15 = vsyncpa [#allocation14], 0
    // Predicated region
    $region2: #{tpu_custom_call.1} parent=1 // pred_check
      _
    $region3: #{tpu_custom_call.1} parent=1 // pred_check_branch
      %17 = sbr.rel (0) target = $region5
    $region4: #{tpu_custom_call.1} parent=1 // pred_region
      %s18 = sadd.s32 0, 0
      %p19 = scmp.lt.s32.totalorder %s18, 0
      %s20 = scalar_select %p19, %s18, 0
      %s21 = smul.u32 2, %s20
      %s23 = ssub.s32 256, 256
      %24 = vsyncadd [#allocation5], %s23
      %s25 = smul.addr %s21, 128
      %s26 = scalar_lea.hbm %s0, %s25
      %s27 = sshll.u32 [#allocation4], 4
      %s28 = int_to_ptr.vmem [resolvable:$true] %s27
      %33 = dma.hbm_to_vmem [thread:$0]  %s26, 256, %s28, [#allocation5], 128, 128, 8
    $region5: #{tpu_custom_call.1} parent=1 // pred_fallthru
      _
    // Predicated region
    $region6: #{tpu_custom_call.1} parent=1 // pred_check
      _
    $region7: #{tpu_custom_call.1} parent=1 // pred_check_branch
      %35 = sbr.rel (0) target = $region9
    $region8: #{tpu_custom_call.1} parent=1 // pred_region
      %s37 = ssub.s32 2048, 2048
      %38 = vsyncadd [#allocation8], %s37
      %s39 = sshll.u32 [#allocation7], 4
      %s40 = int_to_ptr.vmem [resolvable:$true] %s39
      %45 = dma.hbm_to_vmem [thread:$0]  %s1, 2048, %s40, [#allocation8], 128, 128, 8
    $region9: #{tpu_custom_call.1} parent=1 // pred_fallthru
      _
    // Predicated region
    $region10: #{tpu_custom_call.1} parent=1 // pred_check
      _
    $region11: #{tpu_custom_call.1} parent=1 // pred_check_branch
      %47 = sbr.rel (0) target = $region13
    $region12: #{tpu_custom_call.1} parent=1 // pred_region
      %s48 = sadd.s32 0, 0
      %p49 = scmp.lt.s32.totalorder %s48, 0
      %s50 = scalar_select %p49, %s48, 0
      %s51 = smul.u32 2, %s50
      %s53 = ssub.s32 256, 256
      %54 = vsyncadd [#allocation8], %s53
      %s55 = smul.addr %s51, 128
      %s56 = scalar_lea.hbm %s2, %s55
      %s57 = sshll.u32 [#allocation9], 4
      %s58 = int_to_ptr.vmem [resolvable:$true] %s57
      %63 = dma.hbm_to_vmem [thread:$0]  %s56, 256, %s58, [#allocation8], 128, 128, 8
    $region13: #{tpu_custom_call.1} parent=1 // pred_fallthru
      _
    // Predicated region
    $region14: #{tpu_custom_call.1} parent=1 // pred_check
      _
    $region15: #{tpu_custom_call.1} parent=1 // pred_check_branch
      %65 = sbr.rel (0) target = $region17
    $region16: #{tpu_custom_call.1} parent=1 // pred_region
      %s66 = sadd.s32 0, 0
      %p67 = scmp.lt.s32.totalorder %s66, 0
      %s68 = scalar_select %p67, %s66, 0
      %s69 = smul.u32 2, %s68
      %s71 = ssub.s32 256, 256
      %72 = vsyncadd [#allocation11], %s71
      %s73 = smul.addr %s69, 128
      %s74 = scalar_lea.hbm %s3, %s73
      %s75 = sshll.u32 [#allocation10], 4
      %s76 = int_to_ptr.vmem [resolvable:$true] %s75
      %81 = dma.hbm_to_vmem [thread:$0]  %s74, 256, %s76, [#allocation11], 128, 128, 8
    $region17: #{tpu_custom_call.1} parent=1 // pred_fallthru
      _
    // Predicated region
    $region18: #{tpu_custom_call.1} parent=1 // pred_check
      _
    $region19: #{tpu_custom_call.1} parent=1 // pred_check_branch
      %83 = sbr.rel (0) target = $region21
    $region20: #{tpu_custom_call.1} parent=1 // pred_region
      %84 = dma.done [#allocation5], 256
    $region21: #{tpu_custom_call.1} parent=1 // pred_fallthru
      _
    // Predicated region
    $region22: #{tpu_custom_call.1} parent=1 // pred_check
      _
    $region23: #{tpu_custom_call.1} parent=1 // pred_check_branch
      %86 = sbr.rel (0) target = $region25
    $region24: #{tpu_custom_call.1} parent=1 // pred_region
      %87 = dma.done [#allocation8], 2048
    $region25: #{tpu_custom_call.1} parent=1 // pred_fallthru
      _
    // Predicated region
    $region26: #{tpu_custom_call.1} parent=1 // pred_check
      _
    $region27: #{tpu_custom_call.1} parent=1 // pred_check_branch
      %89 = sbr.rel (0) target = $region29
    $region28: #{tpu_custom_call.1} parent=1 // pred_region
      %90 = dma.done [#allocation8], 256
    $region29: #{tpu_custom_call.1} parent=1 // pred_fallthru
      _
    // Predicated region
    $region30: #{tpu_custom_call.1} parent=1 // pred_check
      _
    $region31: #{tpu_custom_call.1} parent=1 // pred_check_branch
      %92 = sbr.rel (0) target = $region33
    $region32: #{tpu_custom_call.1} parent=1 // pred_region
      %93 = dma.done [#allocation11], 256
    $region33: #{tpu_custom_call.1} parent=1 // pred_fallthru
      _
    %s94 = sadd.s32 0, 0
    %p95 = scmp.lt.s32.totalorder %s94, 0
    %s96 = scalar_select %p95, %s94, 0
    %s97 = smul.u32 2, %s96
    %s98 = sadd.s32 0, 0
    %p99 = scmp.lt.s32.totalorder %s98, 0
    %s100 = scalar_select %p99, %s98, 0
    %s101 = smul.u32 2, %s100
    %s102 = sadd.s32 0, 0
    %p103 = scmp.lt.s32.totalorder %s102, 0
    %s104 = scalar_select %p103, %s102, 0
    %s105 = smul.u32 2, %s104
    %p106 = scmp.eq.s32.totalorder 0, 0
    // Predicated region
    $region34: #{tpu_custom_call.1} parent=1 // pred_check
      %p107 = pneg %p106
    $region35: #{tpu_custom_call.1} parent=1 // pred_check_branch
      %109 = sbr.rel (%p107) target = $region37
    $region36: #{tpu_custom_call.1} parent=1 // pred_region
      %110 = vst [vmem:[#allocation2] sm:$0x1] 0.0
      %111 = vst [vmem:[#allocation3] sm:$0x1] 0.0
    $region37: #{tpu_custom_call.1} parent=1 // pred_fallthru
      _
    %v112 = vld [vmem:[#allocation4] sm:$0xff]
    %v113 = vld [vmem:[#allocation4 + $0x8] sm:$0xff]
    %v114 = vld [vmem:[#allocation7] sm:$0xff]
    %v115 = vld [vmem:[#allocation7 + $0x8] sm:$0xff]
    %v116 = vld [vmem:[#allocation7 + $0x10] sm:$0xff]
    %v117 = vld [vmem:[#allocation7 + $0x18] sm:$0xff]
    %v118 = vld [vmem:[#allocation7 + $0x20] sm:$0xff]
    %v119 = vld [vmem:[#allocation7 + $0x28] sm:$0xff]
    %v120 = vld [vmem:[#allocation7 + $0x30] sm:$0xff]
    %v121 = vld [vmem:[#allocation7 + $0x38] sm:$0xff]
    %v122 = vld [vmem:[#allocation7 + $0x40] sm:$0xff]
    %v123 = vld [vmem:[#allocation7 + $0x48] sm:$0xff]
    %v124 = vld [vmem:[#allocation7 + $0x50] sm:$0xff]
    %v125 = vld [vmem:[#allocation7 + $0x58] sm:$0xff]
    %v126 = vld [vmem:[#allocation7 + $0x60] sm:$0xff]
    %v127 = vld [vmem:[#allocation7 + $0x68] sm:$0xff]
    %v128 = vld [vmem:[#allocation7 + $0x70] sm:$0xff]
    %v129 = vld [vmem:[#allocation7 + $0x78] sm:$0xff]
    %v130 = vlaneseq
    %v131 = vand.u32 %v130, 127
    %vm132 = vcmp.lt.s32.totalorder %v131, 0
    %v133 = vsub.s32 0, %v131
    %v134 = vsel %vm132, %v133, %v131
    %v135 = vshrl.u32 %v134, 4
    %v136 = vand.u32 %v134, 15
    %v137 = vsub.s32 0, %v136
    %v138 = vsel %vm132, %v137, %v136
    %vm139 = vcmp.ne.s32.totalorder %v138, 0
    %vm140 = vcmp.lt.s32.totalorder %v138, 0
    %vm141 = vmand %vm140, %vm139
    %v142 = vadd.s32 %v138, 16
    %v143 = vsel %vm141, %v142, %v138
    %vm144 = vcmp.eq.s32.totalorder %v143, %v112
    %vm145 = vcmp.eq.s32.totalorder %v143, %v113
    %v146 = vld [vmem:[#allocation9] sm:$0xff]
    %v147 = vld [vmem:[#allocation9 + $0x8] sm:$0xff]
    %148 = vmax.xlane.f32.xlu0 %v146
    %v149 = vpop.xlane.xlu0 %148
    %150 = vmax.xlane.f32.xlu0 %v147
    %v151 = vpop.xlane.xlu0 %150
    %v152 = vsub.f32 %v146, %v149
    %v153 = vsub.f32 %v147, %v151
    %v154 = vmul.f32 %v152, 1.442695
    %v155 = vpow.pop %v154
    %v156 = vmul.f32 %v153, 1.442695
    %v157 = vpow.pop %v156
    %158 = vmatprep.subr.mxu0 0.0
    %159 = vmatpush1.msra.mxu0 %v129
    %160 = vmatprep.subr.mxu0 0.0
    %161 = vmatpush1.msra.mxu0 %v128
    %162 = vmatprep.subr.mxu0 0.0
    %163 = vmatpush1.msra.mxu0 %v127
    %164 = vmatprep.subr.mxu0 0.0
    %165 = vmatpush1.msra.mxu0 %v126
    %166 = vmatprep.subr.mxu0 0.0
    %167 = vmatpush1.msra.mxu0 %v125
    %168 = vmatprep.subr.mxu0 0.0
    %169 = vmatpush1.msra.mxu0 %v124
    %170 = vmatprep.subr.mxu0 0.0
    %171 = vmatpush1.msra.mxu0 %v123
    %172 = vmatprep.subr.mxu0 0.0
    %173 = vmatpush1.msra.mxu0 %v122
    %174 = vmatprep.subr.mxu0 0.0
    %175 = vmatpush1.msra.mxu0 %v121
    %176 = vmatprep.subr.mxu0 0.0
    %177 = vmatpush1.msra.mxu0 %v120
    %178 = vmatprep.subr.mxu0 0.0
    %179 = vmatpush1.msra.mxu0 %v119
    %180 = vmatprep.subr.mxu0 0.0
    %181 = vmatpush1.msra.mxu0 %v118
    %182 = vmatprep.subr.mxu0 0.0
    %183 = vmatpush1.msra.mxu0 %v117
    %184 = vmatprep.subr.mxu0 0.0
    %185 = vmatpush1.msra.mxu0 %v116
    %186 = vmatprep.subr.mxu0 0.0
    %187 = vmatpush1.msra.mxu0 %v115
    %188 = vmatprep.subr.mxu0 0.0
    %189 = vmatpush1.msra.mxu0 %v114
    %190 = vmatprep.subr.mxu0 0.0
    %191 = vmatpush2.msra.mxu0 0.0
    %192 = vmatprep.subr.mxu0 0.0
    %193 = vmatpush2.msra.mxu0 0.0
    %194 = vmatprep.subr.mxu0 0.0
    %195 = vmatpush2.msra.mxu0 0.0
    %196 = vmatprep.subr.mxu0 0.0
    %197 = vmatpush2.msra.mxu0 0.0
    %198 = vmatprep.subr.mxu0 0.0
    %199 = vmatpush2.msra.mxu0 0.0
    %200 = vmatprep.subr.mxu0 0.0
    %201 = vmatpush2.msra.mxu0 0.0
    %202 = vmatprep.subr.mxu0 0.0
    %203 = vmatpush2.msra.mxu0 0.0
    %204 = vmatprep.subr.mxu0 0.0
    %205 = vmatpush2.msra.mxu0 0.0
    %206 = vmatprep.subr.mxu0 0.0
    %207 = vmatpush2.msra.mxu0 0.0
    %208 = vmatprep.subr.mxu0 0.0
    %209 = vmatpush2.msra.mxu0 0.0
    %210 = vmatprep.subr.mxu0 0.0
    %211 = vmatpush2.msra.mxu0 0.0
    %212 = vmatprep.subr.mxu0 0.0
    %213 = vmatpush2.msra.mxu0 0.0
    %214 = vmatprep.subr.mxu0 0.0
    %215 = vmatpush2.msra.mxu0 0.0
    %216 = vmatprep.subr.mxu0 0.0
    %217 = vmatpush2.msra.mxu0 0.0
    %218 = vmatprep.subr.mxu0 0.0
    %219 = vmatpush2.msra.mxu0 0.0
    %220 = vmatprep.subr.mxu0 0.0
    %221 = vmatpush2.msra.mxu0 0.0
    %222 = vmatprep.mubr.f32.mxu0 0.0
    %223 = vmatmul.mubr.f32.gmra.mxu0 %v155
    %v224 = vpop.f32.mrf.mxu0
    %v225 = vadd.f32 0.0, %v224
    %v226 = vpop.f32.mrf.mxu0
    %227 = vmatprep.mubr.f32.mxu0 0.0
    %228 = vmatmul.mubr.f32.gmra.mxu0 %v157
    %v229 = vpop.f32.mrf.mxu0
    %v230 = vadd.f32 0.0, %v229
    %v231 = vpop.f32.mrf.mxu0
    %232 = vdwg.mxu0
    %v233 = vlog2.pop %v225
    %v234 = vmul.f32 %v233, 0.6931472
    %v235 = vlog2.pop %v230
    %v236 = vmul.f32 %v235, 0.6931472
    %v237 = vadd.f32 %v149, %v234
    %v238 = vadd.f32 %v151, %v236
    %v239 = vmul.f32 %v237, 0.0625
    %v240 = vmul.f32 %v238, 0.0625
    %v241 = vsel %vm144, %v146, 0.0
    %v242 = vsel %vm145, %v147, 0.0
    %v243 = vsub.f32 %v239, %v241
    %v244 = vsub.f32 %v240, %v242
    %v245 = vld [vmem:[#allocation2] sm:$0x1]
    %v246 = vadd.f32 %v243, %v244
    %v247 = vrot.slane %v246, 4
    %v248 = vadd.f32 %v246, %v247
    %v249 = vrot.slane %v248, 2
    %v250 = vadd.f32 %v248, %v249
    %v251 = vrot.slane %v250, 1
    %v252 = vadd.f32 %v250, %v251
    %v253 = vadd.f32 %v245, %v252
    %254 = vst [vmem:[#allocation2] sm:$0x1] %v253
    %v255 = vld [vmem:[#allocation10] sm:$0xff]
    %v256 = vld [vmem:[#allocation10 + $0x8] sm:$0xff]
    %257 = vmax.xlane.f32.xlu0 %v255
    %v258 = vpop.xlane.xlu0 %257
    %259 = vmax.xlane.f32.xlu0 %v256
    %v260 = vpop.xlane.xlu0 %259
    %v261 = vsub.f32 %v255, %v258
    %v262 = vsub.f32 %v256, %v260
    %v263 = vmul.f32 %v261, 1.442695
    %v264 = vpow.pop %v263
    %v265 = vmul.f32 %v262, 1.442695
    %v266 = vpow.pop %v265
    %267 = vmatprep.subr.mxu0 0.0
    %268 = vmatpush1.msra.mxu0 %v129
    %269 = vmatprep.subr.mxu0 0.0
    %270 = vmatpush1.msra.mxu0 %v128
    %271 = vmatprep.subr.mxu0 0.0
    %272 = vmatpush1.msra.mxu0 %v127
    %273 = vmatprep.subr.mxu0 0.0
    %274 = vmatpush1.msra.mxu0 %v126
    %275 = vmatprep.subr.mxu0 0.0
    %276 = vmatpush1.msra.mxu0 %v125
    %277 = vmatprep.subr.mxu0 0.0
    %278 = vmatpush1.msra.mxu0 %v124
    %279 = vmatprep.subr.mxu0 0.0
    %280 = vmatpush1.msra.mxu0 %v123
    %281 = vmatprep.subr.mxu0 0.0
    %282 = vmatpush1.msra.mxu0 %v122
    %283 = vmatprep.subr.mxu0 0.0
    %284 = vmatpush1.msra.mxu0 %v121
    %285 = vmatprep.subr.mxu0 0.0
    %286 = vmatpush1.msra.mxu0 %v120
    %287 = vmatprep.subr.mxu0 0.0
    %288 = vmatpush1.msra.mxu0 %v119
    %289 = vmatprep.subr.mxu0 0.0
    %290 = vmatpush1.msra.mxu0 %v118
    %291 = vmatprep.subr.mxu0 0.0
    %292 = vmatpush1.msra.mxu0 %v117
    %293 = vmatprep.subr.mxu0 0.0
    %294 = vmatpush1.msra.mxu0 %v116
    %295 = vmatprep.subr.mxu0 0.0
    %296 = vmatpush1.msra.mxu0 %v115
    %297 = vmatprep.subr.mxu0 0.0
    %298 = vmatpush1.msra.mxu0 %v114
    %299 = vmatprep.subr.mxu0 0.0
    %300 = vmatpush2.msra.mxu0 0.0
    %301 = vmatprep.subr.mxu0 0.0
    %302 = vmatpush2.msra.mxu0 0.0
    %303 = vmatprep.subr.mxu0 0.0
    %304 = vmatpush2.msra.mxu0 0.0
    %305 = vmatprep.subr.mxu0 0.0
    %306 = vmatpush2.msra.mxu0 0.0
    %307 = vmatprep.subr.mxu0 0.0
    %308 = vmatpush2.msra.mxu0 0.0
    %309 = vmatprep.subr.mxu0 0.0
    %310 = vmatpush2.msra.mxu0 0.0
    %311 = vmatprep.subr.mxu0 0.0
    %312 = vmatpush2.msra.mxu0 0.0
    %313 = vmatprep.subr.mxu0 0.0
    %314 = vmatpush2.msra.mxu0 0.0
    %315 = vmatprep.subr.mxu0 0.0
    %316 = vmatpush2.msra.mxu0 0.0
    %317 = vmatprep.subr.mxu0 0.0
    %318 = vmatpush2.msra.mxu0 0.0
    %319 = vmatprep.subr.mxu0 0.0
    %320 = vmatpush2.msra.mxu0 0.0
    %321 = vmatprep.subr.mxu0 0.0
    %322 = vmatpush2.msra.mxu0 0.0
    %323 = vmatprep.subr.mxu0 0.0
    %324 = vmatpush2.msra.mxu0 0.0
    %325 = vmatprep.subr.mxu0 0.0
    %326 = vmatpush2.msra.mxu0 0.0
    %327 = vmatprep.subr.mxu0 0.0
    %328 = vmatpush2.msra.mxu0 0.0
    %329 = vmatprep.subr.mxu0 0.0
    %330 = vmatpush2.msra.mxu0 0.0
    %331 = vmatprep.mubr.f32.mxu0 0.0
    %332 = vmatmul.mubr.f32.gmra.mxu0 %v264
    %v333 = vpop.f32.mrf.mxu0
    %v334 = vadd.f32 0.0, %v333
    %v335 = vpop.f32.mrf.mxu0
    %336 = vmatprep.mubr.f32.mxu0 0.0
    %337 = vmatmul.mubr.f32.gmra.mxu0 %v266
    %v338 = vpop.f32.mrf.mxu0
    %v339 = vadd.f32 0.0, %v338
    %v340 = vpop.f32.mrf.mxu0
    %341 = vdwg.mxu0
    %v342 = vlog2.pop %v334
    %v343 = vmul.f32 %v342, 0.6931472
    %v344 = vlog2.pop %v339
    %v345 = vmul.f32 %v344, 0.6931472
    %v346 = vadd.f32 %v258, %v343
    %v347 = vadd.f32 %v260, %v345
    %v348 = vmul.f32 %v346, 0.0625
    %v349 = vmul.f32 %v347, 0.0625
    %v350 = vsel %vm144, %v255, 0.0
    %v351 = vsel %vm145, %v256, 0.0
    %v352 = vsub.f32 %v348, %v350
    %v353 = vsub.f32 %v349, %v351
    %v354 = vld [vmem:[#allocation3] sm:$0x1]
    %v355 = vadd.f32 %v352, %v353
    %v356 = vrot.slane %v355, 4
    %v357 = vadd.f32 %v355, %v356
    %v358 = vrot.slane %v357, 2
    %v359 = vadd.f32 %v357, %v358
    %v360 = vrot.slane %v359, 1
    %v361 = vadd.f32 %v359, %v360
    %v362 = vadd.f32 %v354, %v361
    %363 = vst [vmem:[#allocation3] sm:$0x1] %v362
    // Predicated region
    $region38: #{tpu_custom_call.1} parent=1 // pred_check
      %p364 = pneg %p106
    $region39: #{tpu_custom_call.1} parent=1 // pred_check_branch
      %366 = sbr.rel (%p364) target = $region41
    $region40: #{tpu_custom_call.1} parent=1 // pred_region
      %v367 = vld [vmem:[#allocation2] sm:$0x1]
      %vm368 = vcmask 1040384
      %v369 = vsel %vm368, %v367, 0.0
      %370 = vadd.xlane.f32.xlu0 %v369
      %v371 = vpop.xlane.xlu0 %370
      %v372 = vrot.slane %v371, 4
      %v373 = vadd.f32 %v371, %v372
      %v374 = vrot.slane %v373, 2
      %v375 = vadd.f32 %v373, %v374
      %v376 = vrot.slane %v375, 1
      %v377 = vadd.f32 %v375, %v376
      %s378 = vtos %v377
      %v379 = vstv %s378
      %vm380 = vcmask 0
      %381 = vst.msk [vmem:[#allocation12] sm:$0x1] %vm380, %v379
      %v382 = vld [vmem:[#allocation3] sm:$0x1]
      %v383 = vsel %vm368, %v382, 0.0
      %384 = vadd.xlane.f32.xlu0 %v383
      %v385 = vpop.xlane.xlu0 %384
      %v386 = vrot.slane %v385, 4
      %v387 = vadd.f32 %v385, %v386
      %v388 = vrot.slane %v387, 2
      %v389 = vadd.f32 %v387, %v388
      %v390 = vrot.slane %v389, 1
      %v391 = vadd.f32 %v389, %v390
      %s392 = vtos %v391
      %v393 = vstv %s392
      %394 = vst.msk [vmem:[#allocation13] sm:$0x1] %vm380, %v393
    $region41: #{tpu_custom_call.1} parent=1 // pred_fallthru
      _
    // Predicated region
    $region42: #{tpu_custom_call.1} parent=1 // pred_check
      _
    $region43: #{tpu_custom_call.1} parent=1 // pred_check_branch
      %396 = sbr.rel (0) target = $region45
    $region44: #{tpu_custom_call.1} parent=1 // pred_region
      %s398 = ssub.s32 16, 16
      %399 = vsyncadd [#allocation6], %s398
      %s401 = sshll.u32 [#allocation12], 4
      %s402 = int_to_ptr.vmem [resolvable:$true] %s401
      %404 = dma.vmem_to_hbm [thread:$0]  %s402, 16, %s4, [#allocation6]
    $region45: #{tpu_custom_call.1} parent=1 // pred_fallthru
      _
    // Predicated region
    $region46: #{tpu_custom_call.1} parent=1 // pred_check
      _
    $region47: #{tpu_custom_call.1} parent=1 // pred_check_branch
      %406 = sbr.rel (0) target = $region49
    $region48: #{tpu_custom_call.1} parent=1 // pred_region
      %s408 = ssub.s32 16, 16
      %409 = vsyncadd [#allocation14], %s408
      %s411 = sshll.u32 [#allocation13], 4
      %s412 = int_to_ptr.vmem [resolvable:$true] %s411
      %414 = dma.vmem_to_hbm [thread:$0]  %s412, 16, %s5, [#allocation14]
    $region49: #{tpu_custom_call.1} parent=1 // pred_fallthru
      _
    // Predicated region
    $region50: #{tpu_custom_call.1} parent=1 // pred_check
      _
    $region51: #{tpu_custom_call.1} parent=1 // pred_check_branch
      %416 = sbr.rel (0) target = $region53
    $region52: #{tpu_custom_call.1} parent=1 // pred_region
      %417 = dma.done [#allocation6], 16
    $region53: #{tpu_custom_call.1} parent=1 // pred_fallthru
      _
    // Predicated region
    $region54: #{tpu_custom_call.1} parent=1 // pred_check
      _
    $region55: #{tpu_custom_call.1} parent=1 // pred_check_branch
      %419 = sbr.rel (0) target = $region57
    $region56: #{tpu_custom_call.1} parent=1 // pred_region
      %420 = dma.done [#allocation14], 16
    $region57: #{tpu_custom_call.1} parent=1 // pred_fallthru
      _
    %421 = vsyncpa [#allocation5], 1
    %422 = vsyncpa [#allocation8], 1
    %423 = vsyncpa [#allocation11], 1
    %424 = vsyncpa [#allocation6], 1
    %425 = vsyncpa [#allocation14], 1

</llo_original>
